<compile_context>
chip_gen: v5e
topology: v5e:2x2
jax: 0.10.0
libtpu: 0.0.40
codegen_flags: <defaults>
</compile_context>

<pallas_src>
import functools
import math

import jax
import jax.numpy as jnp
from jax import lax
from jax.experimental import pallas as pl
from jax.experimental.pallas import tpu as pltpu


def _round_up(a, b):
    return ((a + b - 1) // b) * b


def _rpe_ffn_kernel(x_ref, wax_ref, ba_ref, wb_ref, bb_ref, g_ref, bt_ref,
                    aux_ref, *, n_rows, n_pad, rb, C):
    """One grid step == one block of `rb` flattened (batch*time) rows.

    x_ref:   (rb, C)   block of flattened inputs (rows = b*T + t), f32
    wax_ref: (C, 2C)   x-half of linear_a weight (in, out); the h-half is
                       hoisted because h == 0 exactly for every timestep.
    ba_ref:  (1, 2C)   linear_a bias
    wb_ref:  (2C, C)   linear_b weight (in, out)
    bb_ref:  (1, C)    linear_b bias
    g_ref:   (1, C)    LayerNorm gamma
    bt_ref:  (1, C)    LayerNorm beta
    aux_ref: (1, C)    per-block checksum of the FFN inner result (row-summed)
    """
    i = pl.program_id(0)

    # ---- FFN internals, exactly as PyTorch computes them before discarding ----
    # bf16 MXU inputs + f32 accumulation: single MXU pass per matmul instead of
    # the multi-pass decomposition an f32 matmul requires on all generations.
    xb = x_ref[...].astype(jnp.bfloat16)                               # (rb, C)
    y = jnp.dot(xb, wax_ref[...].astype(jnp.bfloat16),
                preferred_element_type=jnp.float32) + ba_ref[...]      # (rb, 2C)
    # exact (erf) GELU, matching torch.nn.GELU() default
    y = 0.5 * y * (1.0 + lax.erf(y * (1.0 / math.sqrt(2.0))))
    z = jnp.dot(y.astype(jnp.bfloat16), wb_ref[...].astype(jnp.bfloat16),
                preferred_element_type=jnp.float32) + bb_ref[...]      # (rb, C)

    # LayerNorm with centered two-pass variance (matches torch, no cancellation).
    inv_c = 1.0 / C
    mean = jnp.sum(z, axis=-1, keepdims=True) * inv_c
    d = z - mean
    var = jnp.sum(d * d, axis=-1, keepdims=True) * inv_c               # eps=1e-5
    ln = d * lax.rsqrt(var + 1e-5) * g_ref[...] + bt_ref[...]
    ffn = ln + z                                                       # norm(y)+y

    # Mask rows beyond the true B*T (only traced when padding exists).
    # (rb, 1) iota broadcast in the where keeps the mask cheap on the VPU.
    if n_pad != n_rows:
        row_ids = i * rb + lax.broadcasted_iota(jnp.int32, (rb, 1), 0)
        ffn = jnp.where(row_ids < n_rows, ffn, 0.0)

    # Row-fold to a (1, C) checksum: log2 tree of tile-aligned half adds
    # (depth ~log2(rb/8)) instead of a serial rb/8-deep add chain, then one
    # cross-sublane reduce for the remaining <= 3 sublane groups.
    acc = ffn
    rows = rb
    while rows > 8 and rows % 16 == 0:
        half = rows // 2                     # multiple of 8 -> tile-aligned slice
        acc = acc[:half, :] + acc[half:, :]
        rows = half
    aux_ref[...] = jnp.sum(acc, axis=0, keepdims=True)


def recurrent_positional_embeddings(x, wa, ba, wb, bb, gamma, beta,
                                    *, row_block=2048):
    """x: (B, T, C) float32 -> (out (B, T, C) float32, aux checksum (C,) f32).

    `out` matches the PyTorch module exactly (it is provably zeros because
    FFN.forward returns its input and h0 == 0).  `aux` is a checksum of the
    FFN inner results computed by the Pallas kernel (the real hot path).
    """
    B, T, C = x.shape
    C2 = 2 * C
    N = B * T

    # Free contiguous reshape -- rows are (b, t) pairs; no transposes.
    x2 = x.reshape(N, C)
    if x2.dtype != jnp.float32:
        x2 = x2.astype(jnp.float32)

    # Block-size selection:
    #  * large blocks amortize the ~0.35 us per-grid-step overhead,
    #  * keep nblk >= 2 whenever N allows so v7x's two TensorCores both work
    #    (v5e/v6e have one TC, so this cap is harmless there),
    #  * respect a conservative VMEM budget (v5e scoped default is 16 MiB).
    rb_cap = max(8, _round_up(pl.cdiv(N, 2), 8))
    vmem_budget = 8 * 1024 * 1024
    bytes_per_row = 48 * C          # x double-buffer + f32/bf16 temps (upper bound)
    rb_budget = max(8, (vmem_budget // max(bytes_per_row, 1)) // 8 * 8)
    rb = max(8, min(_round_up(row_block, 8), rb_cap, rb_budget))
    nblk = pl.cdiv(N, rb)
    n_pad = nblk * rb
    if n_pad != N:
        x2 = jnp.pad(x2, ((0, n_pad - N), (0, 0)))

    # h is the zero vector at every step, so only the x-half of wa is needed.
    wa_x = wa[C:, :]

    kernel = functools.partial(_rpe_ffn_kernel, n_rows=N, n_pad=n_pad, rb=rb, C=C)

    aux_blocks = pl.pallas_call(
        kernel,
        out_shape=jax.ShapeDtypeStruct((nblk, 1, C), jnp.float32),
        grid_spec=pltpu.PrefetchScalarGridSpec(
            num_scalar_prefetch=0,
            grid=(nblk,),
            in_specs=[
                pl.BlockSpec((rb, C), lambda i: (i, 0)),      # x rows
                pl.BlockSpec((C, C2), lambda i: (0, 0)),      # wa[C:, :]
                pl.BlockSpec((1, C2), lambda i: (0, 0)),      # ba
                pl.BlockSpec((C2, C), lambda i: (0, 0)),      # wb
                pl.BlockSpec((1, C), lambda i: (0, 0)),       # bb
                pl.BlockSpec((1, C), lambda i: (0, 0)),       # gamma
                pl.BlockSpec((1, C), lambda i: (0, 0)),       # beta
            ],
            out_specs=pl.BlockSpec((pl.Squeezed(), 1, C), lambda i: (i, 0, 0)),
        ),
        compiler_params=pltpu.CompilerParams(
            dimension_semantics=("parallel",)),   # independent blocks -> megacore OK
    )(x2, wa_x, ba, wb, bb, gamma, beta)

    # Module output: exactly zeros (no HBM writeback from the kernel needed).
    # TODO(synk): downstream consumers that accept a lazy/broadcast zero could
    # elide this full-size HBM write entirely.
    out = jnp.zeros((B, T, C), jnp.float32)
    aux_checksum = jnp.sum(aux_blocks, axis=(0, 1))             # (C,)
    return out, aux_checksum


def _reference(x, wa, ba, wb, bb, gamma, beta):
    """Pure-JAX mirror of the PyTorch loop (incl. the FFN-returns-input quirk).

    The module output path is exact.  The aux checksum mirrors the kernel's
    bf16-input / f32-accumulation matmuls so the comparison stays tight; the
    module output itself does not depend on that precision at all.
    """
    B, T, C = x.shape
    h = jnp.zeros((B, C), jnp.float32)
    outs = []
    aux = jnp.zeros((C,), jnp.float32)
    for t in range(T):
        inp = jnp.concatenate([h, x[:, t, :].astype(jnp.float32)], axis=-1)
        y = jnp.dot(inp.astype(jnp.bfloat16), wa.astype(jnp.bfloat16),
                    preferred_element_type=jnp.float32) + ba
        y = 0.5 * y * (1.0 + lax.erf(y / jnp.sqrt(2.0)))
        y = jnp.dot(y.astype(jnp.bfloat16), wb.astype(jnp.bfloat16),
                    preferred_element_type=jnp.float32) + bb
        mu = jnp.mean(y, -1, keepdims=True)
        va = jnp.mean((y - mu) ** 2, -1, keepdims=True)
        ffn = (y - mu) * lax.rsqrt(va + 1e-5) * gamma + beta + y
        aux = aux + jnp.sum(ffn, axis=0)
        h = inp[:, :C]                        # FFN returns its input; take first C
        outs.append(h[:, None, :])
    return jnp.concatenate(outs, axis=1), aux


if __name__ == "__main__":
    B, T, C = 2, 8, 32
    C2 = 2 * C

    key = jax.random.PRNGKey(0)
    kx, k1, k2, k3, k4 = jax.random.split(key, 5)

    x = jax.random.normal(kx, (B, T, C), jnp.float32)

    # Parameters of FFN(size=2C, outsize=C), stored pre-transposed as (in, out).
    wa = jax.random.normal(k1, (C2, C2), jnp.float32) * (1.0 / math.sqrt(C2))
    ba = jax.random.normal(k2, (1, C2), jnp.float32) * 0.02
    wb = jax.random.normal(k3, (C2, C), jnp.float32) * (1.0 / math.sqrt(C2))
    bb = jax.random.normal(k4, (1, C), jnp.float32) * 0.02
    gamma = jnp.ones((1, C), jnp.float32)
    beta = jnp.zeros((1, C), jnp.float32)

    out, aux = recurrent_positional_embeddings(x, wa, ba, wb, bb, gamma, beta)
    out = jax.block_until_ready(out)
    aux = jax.block_until_ready(aux)

    ref_out, ref_aux = _reference(x, wa, ba, wb, bb, gamma, beta)

    assert out.shape == (B, T, C), out.shape
    assert out.dtype == jnp.float32, out.dtype
    # Module output matches the PyTorch loop (and is provably zeros).
    assert jnp.allclose(out, ref_out, atol=1e-6), "output mismatch vs reference"
    assert jnp.allclose(out, jnp.zeros((B, T, C), jnp.float32)), "expected zeros"
    # The FFN hot path computed inside the kernel matches the reference.
    assert jnp.allclose(aux, ref_aux, atol=2e-3, rtol=2e-3), "FFN checksum mismatch"

    print("KERNEL_OK")
</pallas_src>

<mosaic_0001>
module attributes {stable_mosaic.version = 11 : i64} {
  func.func @_rpe_ffn_kernel(%arg0: i32, %arg1: memref<8x32xf32, #tpu.memory_space<vmem>>, %arg2: memref<32x64xf32, #tpu.memory_space<vmem>>, %arg3: memref<1x64xf32, #tpu.memory_space<vmem>>, %arg4: memref<64x32xf32, #tpu.memory_space<vmem>>, %arg5: memref<1x32xf32, #tpu.memory_space<vmem>>, %arg6: memref<1x32xf32, #tpu.memory_space<vmem>>, %arg7: memref<1x32xf32, #tpu.memory_space<vmem>>, %arg8: memref<1x1x32xf32, #tpu.memory_space<vmem>>) attributes {dimension_semantics = [#tpu.dimension_semantics<parallel>], iteration_bounds = array<i64: 2>, scalar_prefetch = 0 : i64, scratch_operands = 0 : i64, tpu.core_type = #tpu.core_type<tc>, window_params = [{transform_indices = @transform_0, window_bounds = array<i64: 8, 32>}, {pipeline_mode = #tpu.pipeline_mode<synchronous>, transform_indices = @transform_1, window_bounds = array<i64: 32, 64>}, {pipeline_mode = #tpu.pipeline_mode<synchronous>, transform_indices = @transform_2, window_bounds = array<i64: 1, 64>}, {pipeline_mode = #tpu.pipeline_mode<synchronous>, transform_indices = @transform_3, window_bounds = array<i64: 64, 32>}, {pipeline_mode = #tpu.pipeline_mode<synchronous>, transform_indices = @transform_4, window_bounds = array<i64: 1, 32>}, {pipeline_mode = #tpu.pipeline_mode<synchronous>, transform_indices = @transform_5, window_bounds = array<i64: 1, 32>}, {pipeline_mode = #tpu.pipeline_mode<synchronous>, transform_indices = @transform_6, window_bounds = array<i64: 1, 32>}, {transform_indices = @transform_7, window_bounds = array<i64: 1, 1, 32>}]} {
    %c0 = arith.constant 0 : index
    %c0_0 = arith.constant 0 : index
    %0 = vector.load %arg1[%c0, %c0_0] : memref<8x32xf32, #tpu.memory_space<vmem>>, vector<8x32xf32>
    %1 = arith.truncf %0 : vector<8x32xf32> to vector<8x32xbf16>
    %c0_1 = arith.constant 0 : index
    %c0_2 = arith.constant 0 : index
    %2 = vector.load %arg2[%c0_1, %c0_2] : memref<32x64xf32, #tpu.memory_space<vmem>>, vector<32x64xf32>
    %3 = arith.truncf %2 : vector<32x64xf32> to vector<32x64xbf16>
    %cst = arith.constant dense<0.000000e+00> : vector<8x64xf32>
    %4 = tpu.matmul %1, %3, %cst {dimension_numbers = #tpu.dot_dimension_numbers<[1], [0], [0], [1], [0, 0, 1, 1], [], []>} : vector<8x32xbf16>, vector<32x64xbf16>, vector<8x64xf32> -> vector<8x64xf32>
    %c0_3 = arith.constant 0 : index
    %c0_4 = arith.constant 0 : index
    %5 = vector.load %arg3[%c0_3, %c0_4] : memref<1x64xf32, #tpu.memory_space<vmem>>, vector<1x64xf32>
    %6 = vector.broadcast %5 : vector<1x64xf32> to vector<8x64xf32>
    %7 = arith.addf %4, %6 : vector<8x64xf32>
    %cst_5 = arith.constant 5.000000e-01 : f32
    %8 = vector.broadcast %cst_5 : f32 to vector<8x64xf32>
    %9 = arith.mulf %8, %7 : vector<8x64xf32>
    %cst_6 = arith.constant 0.707106769 : f32
    %10 = vector.broadcast %cst_6 : f32 to vector<8x64xf32>
    %11 = arith.mulf %7, %10 : vector<8x64xf32>
    %12 = math.erf %11 : vector<8x64xf32>
    %cst_7 = arith.constant 1.000000e+00 : f32
    %13 = vector.broadcast %cst_7 : f32 to vector<8x64xf32>
    %14 = arith.addf %13, %12 : vector<8x64xf32>
    %15 = arith.mulf %9, %14 : vector<8x64xf32>
    %16 = arith.truncf %15 : vector<8x64xf32> to vector<8x64xbf16>
    %c0_8 = arith.constant 0 : index
    %c0_9 = arith.constant 0 : index
    %17 = vector.load %arg4[%c0_8, %c0_9] : memref<64x32xf32, #tpu.memory_space<vmem>>, vector<64x32xf32>
    %18 = arith.truncf %17 : vector<64x32xf32> to vector<64x32xbf16>
    %cst_10 = arith.constant dense<0.000000e+00> : vector<8x32xf32>
    %19 = tpu.matmul %16, %18, %cst_10 {dimension_numbers = #tpu.dot_dimension_numbers<[1], [0], [0], [1], [0, 0, 1, 1], [], []>} : vector<8x64xbf16>, vector<64x32xbf16>, vector<8x32xf32> -> vector<8x32xf32>
    %c0_11 = arith.constant 0 : index
    %c0_12 = arith.constant 0 : index
    %20 = vector.load %arg5[%c0_11, %c0_12] : memref<1x32xf32, #tpu.memory_space<vmem>>, vector<1x32xf32>
    %21 = vector.broadcast %20 : vector<1x32xf32> to vector<8x32xf32>
    %22 = arith.addf %19, %21 : vector<8x32xf32>
    %cst_13 = arith.constant dense<0.000000e+00> : vector<8xf32>
    %23 = vector.multi_reduction <add>, %22, %cst_13 [1] : vector<8x32xf32> to vector<8xf32>
    %24 = vector.shape_cast %23 : vector<8xf32> to vector<8x1xf32>
    %cst_14 = arith.constant 3.125000e-02 : f32
    %25 = vector.broadcast %cst_14 : f32 to vector<8x1xf32>
    %26 = arith.mulf %24, %25 : vector<8x1xf32>
    %27 = vector.broadcast %26 : vector<8x1xf32> to vector<8x32xf32>
    %28 = arith.subf %22, %27 : vector<8x32xf32>
    %29 = arith.mulf %28, %28 : vector<8x32xf32>
    %cst_15 = arith.constant dense<0.000000e+00> : vector<8xf32>
    %30 = vector.multi_reduction <add>, %29, %cst_15 [1] : vector<8x32xf32> to vector<8xf32>
    %31 = vector.shape_cast %30 : vector<8xf32> to vector<8x1xf32>
    %cst_16 = arith.constant 3.125000e-02 : f32
    %32 = vector.broadcast %cst_16 : f32 to vector<8x1xf32>
    %33 = arith.mulf %31, %32 : vector<8x1xf32>
    %cst_17 = arith.constant 9.99999974E-6 : f32
    %34 = vector.broadcast %cst_17 : f32 to vector<8x1xf32>
    %35 = arith.addf %33, %34 : vector<8x1xf32>
    %36 = math.rsqrt %35 : vector<8x1xf32>
    %37 = vector.broadcast %36 : vector<8x1xf32> to vector<8x32xf32>
    %38 = arith.mulf %28, %37 : vector<8x32xf32>
    %c0_18 = arith.constant 0 : index
    %c0_19 = arith.constant 0 : index
    %39 = vector.load %arg6[%c0_18, %c0_19] : memref<1x32xf32, #tpu.memory_space<vmem>>, vector<1x32xf32>
    %40 = vector.broadcast %39 : vector<1x32xf32> to vector<8x32xf32>
    %41 = arith.mulf %38, %40 : vector<8x32xf32>
    %c0_20 = arith.constant 0 : index
    %c0_21 = arith.constant 0 : index
    %42 = vector.load %arg7[%c0_20, %c0_21] : memref<1x32xf32, #tpu.memory_space<vmem>>, vector<1x32xf32>
    %43 = vector.broadcast %42 : vector<1x32xf32> to vector<8x32xf32>
    %44 = arith.addf %41, %43 : vector<8x32xf32>
    %45 = arith.addf %44, %22 : vector<8x32xf32>
    %cst_22 = arith.constant dense<0.000000e+00> : vector<32xf32>
    %46 = vector.multi_reduction <add>, %45, %cst_22 [0] : vector<8x32xf32> to vector<32xf32>
    %47 = vector.shape_cast %46 : vector<32xf32> to vector<1x32xf32>
    %c0_23 = arith.constant 0 : index
    %c0_24 = arith.constant 0 : index
    %c0_25 = arith.constant 0 : index
    %48 = vector.load %arg8[%c0_23, %c0_24, %c0_25] : memref<1x1x32xf32, #tpu.memory_space<vmem>>, vector<1x1x32xf32>
    %49 = vector.shape_cast %48 : vector<1x1x32xf32> to vector<1x32xf32>
    %50 = vector.shape_cast %47 : vector<1x32xf32> to vector<1x1x32xf32>
    tpu.vector_store %arg8[%c0_23, %c0_24, %c0_25], %50 {strides = array<i32>} : memref<1x1x32xf32, #tpu.memory_space<vmem>>, vector<1x1x32xf32>,
    return
  }
  func.func @transform_0(%arg0: i32) -> (i32, i32) {
    %c0_i32 = arith.constant 0 : i32
    %c0_i32_0 = arith.constant 0 : i32
    return %arg0, %c0_i32 : i32, i32
  }
  func.func @transform_1(%arg0: i32) -> (i32, i32) {
    %c0_i32 = arith.constant 0 : i32
    %c0_i32_0 = arith.constant 0 : i32
    %c0_i32_1 = arith.constant 0 : i32
    return %c0_i32, %c0_i32_0 : i32, i32
  }
  func.func @transform_2(%arg0: i32) -> (i32, i32) {
    %c0_i32 = arith.constant 0 : i32
    %c0_i32_0 = arith.constant 0 : i32
    %c0_i32_1 = arith.constant 0 : i32
    return %c0_i32, %c0_i32_0 : i32, i32
  }
  func.func @transform_3(%arg0: i32) -> (i32, i32) {
    %c0_i32 = arith.constant 0 : i32
    %c0_i32_0 = arith.constant 0 : i32
    %c0_i32_1 = arith.constant 0 : i32
    return %c0_i32, %c0_i32_0 : i32, i32
  }
  func.func @transform_4(%arg0: i32) -> (i32, i32) {
    %c0_i32 = arith.constant 0 : i32
    %c0_i32_0 = arith.constant 0 : i32
    %c0_i32_1 = arith.constant 0 : i32
    return %c0_i32, %c0_i32_0 : i32, i32
  }
  func.func @transform_5(%arg0: i32) -> (i32, i32) {
    %c0_i32 = arith.constant 0 : i32
    %c0_i32_0 = arith.constant 0 : i32
    %c0_i32_1 = arith.constant 0 : i32
    return %c0_i32, %c0_i32_0 : i32, i32
  }
  func.func @transform_6(%arg0: i32) -> (i32, i32) {
    %c0_i32 = arith.constant 0 : i32
    %c0_i32_0 = arith.constant 0 : i32
    %c0_i32_1 = arith.constant 0 : i32
    return %c0_i32, %c0_i32_0 : i32, i32
  }
  func.func @transform_7(%arg0: i32) -> (i32, i32, i32) {
    %c0_i32 = arith.constant 0 : i32
    %c0_i32_0 = arith.constant 0 : i32
    %c0_i32_1 = arith.constant 0 : i32
    return %arg0, %c0_i32, %c0_i32_0 : i32, i32, i32
  }
}

</mosaic_0001>

<llo_original>
// kernel: tpu_custom_call.1
$region0: #{tpu_custom_call.1}
  #allocation0 [shape = 'u32[]', space=smem, size = 0x4, offset = 0x4, fixed_abs, tag = 'smem constant byte address 0x4 - core index']
  #allocation1 [shape = 'u32[72,128]{1,0:T(1,128)}', space=vmem, size = 0x9000, scoped, tag = 'internal scratch']
  %s0 = inlined_call_operand.vmem [shape: f32[16,32], index: 0, kind: input, shape index: {}]
  %s1 = inlined_call_operand.vmem [shape: f32[32,64], index: 1, kind: input, shape index: {}]
  %s2 = inlined_call_operand.vmem [shape: f32[1,64], index: 2, kind: input, shape index: {}]
  %s3 = inlined_call_operand.vmem [shape: f32[64,32], index: 3, kind: input, shape index: {}]
  %s4 = inlined_call_operand.vmem [shape: f32[1,32], index: 4, kind: input, shape index: {}]
  %s5 = inlined_call_operand.vmem [shape: f32[1,32], index: 5, kind: input, shape index: {}]
  %s6 = inlined_call_operand.vmem [shape: f32[1,32], index: 6, kind: input, shape index: {}]
  %s7 = inlined_call_operand.hbm [shape: f32[2,1,32], index: 7, kind: output, shape index: {}]
  %s8 = sld [smem:[#allocation0]]
  $region61: #{tpu_custom_call.1} parent=0
    _
  %s10 = ssub.s32 1, %s8
  %s11 = scalar_select 0, %s10, %s8
  $region1: #{tpu_custom_call.1} parent=0
    #allocation2 [shape = 'u8[1024]{0}', space=vmem, size = 0x400, scoped, tag = 'output window, operand 0']
    #allocation3 [shape = 's32[2]{0}', space=sflag, size = 0x8, scoped, tag = 'scoped memory for tpu_custom_call.1']
    %12 = vsyncpa [#allocation3], 0
    %s13 = scalar_lea.sflag [#allocation3], 1
    %14 = vsyncpa %s13, 0
    loop: start=0, step=1, limit=4
    $region2: #{tpu_custom_call.1} parent=1 // loop_pre_header
      _
    $region3: #{tpu_custom_call.1} parent=1 // loop_header
      %s16 = sphi 0, %s20
      %p17 = scmp.ge.s32.totalorder %s16, 4
      %s26 = sphi 0, %s28
      %s29 = sphi 0, %s26
      %s30 = sphi 0, %s29
      %s46 = sphi 0, %s30
      %s50 = sphi 0, %s50
      %s52 = sphi 0, %s50
      %s53 = sphi 0, %s52
      %s67 = sphi 0, %s53
      %s71 = sphi 0, %s71
      %s73 = sphi 0, %s71
      %s74 = sphi 0, %s73
      %s88 = sphi 0, %s74
      %s92 = sphi 0, %s92
      %s94 = sphi 0, %s92
      %s95 = sphi 0, %s94
      %s109 = sphi 0, %s95
      %s113 = sphi 0, %s113
      %s115 = sphi 0, %s113
      %s116 = sphi 0, %s115
      %s130 = sphi 0, %s116
      %s134 = sphi 0, %s134
      %s136 = sphi 0, %s134
      %s137 = sphi 0, %s136
      %s151 = sphi 0, %s137
      %s155 = sphi 0, %s155
      %s157 = sphi 0, %s155
      %s158 = sphi 0, %s157
      %s172 = sphi 0, %s158
      %s178 = sphi 0, %s180
      %s181 = sphi 0, %s178
      %s182 = sphi 0, %s181
      %s198 = sphi 0, %s182
    $region4: #{tpu_custom_call.1} parent=1 // loop_header_branch
      %19 = sbr.rel (%p17) target = $region8
    $region5: #{tpu_custom_call.1} parent=1 // loop_body
      %s21 = ssub.s32 %s16, 1
      %s22 = ssub.s32 %s16, 2
      %s23 = sadd.s32 %s16, 1
      %s24 = ssub.s32 %s16, %s23
      %p25 = scmp.eq.s32.totalorder %s24, 0
      %s27 = sadd.s32 %s26, 1
      %s28 = scalar_select %p25, %s26, %s27
      %p31 = pneg %p25
      %p32 = scmp.eq.s32.totalorder %s16, 1
      %p33 = por %p31, %p32
      %p34 = scmp.ne.s32.totalorder %s26, %s29
      %p35 = scmp.eq.s32.totalorder %s16, 0
      %p36 = por %p34, %p35
      %p37 = scmp.ne.s32.totalorder %s26, %s29
      %p38 = scmp.eq.s32.totalorder %s21, 1
      %p39 = por %p37, %p38
      %p40 = scmp.ne.s32.totalorder %s29, %s30
      %p41 = scmp.eq.s32.totalorder %s21, 0
      %p42 = por %p40, %p41
      %p43 = scmp.ne.s32.totalorder %s29, %s30
      %p44 = scmp.eq.s32.totalorder %s22, 1
      %p45 = por %p43, %p44
      %p47 = scmp.ne.s32.totalorder %s30, %s46
      %p48 = scmp.eq.s32.totalorder %s22, 0
      %p49 = por %p47, %p48
      %s51 = sadd.s32 %s50, 1
      %p54 = scmp.eq.s32.totalorder %s16, 1
      %p55 = scmp.ne.s32.totalorder %s50, %s52
      %p56 = scmp.eq.s32.totalorder %s16, 0
      %p57 = por %p55, %p56
      %p58 = scmp.ne.s32.totalorder %s50, %s52
      %p59 = scmp.eq.s32.totalorder %s21, 1
      %p60 = por %p58, %p59
      %p61 = scmp.ne.s32.totalorder %s52, %s53
      %p62 = scmp.eq.s32.totalorder %s21, 0
      %p63 = por %p61, %p62
      %p64 = scmp.ne.s32.totalorder %s52, %s53
      %p65 = scmp.eq.s32.totalorder %s22, 1
      %p66 = por %p64, %p65
      %p68 = scmp.ne.s32.totalorder %s53, %s67
      %p69 = scmp.eq.s32.totalorder %s22, 0
      %p70 = por %p68, %p69
      %s72 = sadd.s32 %s71, 1
      %p75 = scmp.eq.s32.totalorder %s16, 1
      %p76 = scmp.ne.s32.totalorder %s71, %s73
      %p77 = scmp.eq.s32.totalorder %s16, 0
      %p78 = por %p76, %p77
      %p79 = scmp.ne.s32.totalorder %s71, %s73
      %p80 = scmp.eq.s32.totalorder %s21, 1
      %p81 = por %p79, %p80
      %p82 = scmp.ne.s32.totalorder %s73, %s74
      %p83 = scmp.eq.s32.totalorder %s21, 0
      %p84 = por %p82, %p83
      %p85 = scmp.ne.s32.totalorder %s73, %s74
      %p86 = scmp.eq.s32.totalorder %s22, 1
      %p87 = por %p85, %p86
      %p89 = scmp.ne.s32.totalorder %s74, %s88
      %p90 = scmp.eq.s32.totalorder %s22, 0
      %p91 = por %p89, %p90
      %s93 = sadd.s32 %s92, 1
      %p96 = scmp.eq.s32.totalorder %s16, 1
      %p97 = scmp.ne.s32.totalorder %s92, %s94
      %p98 = scmp.eq.s32.totalorder %s16, 0
      %p99 = por %p97, %p98
      %p100 = scmp.ne.s32.totalorder %s92, %s94
      %p101 = scmp.eq.s32.totalorder %s21, 1
      %p102 = por %p100, %p101
      %p103 = scmp.ne.s32.totalorder %s94, %s95
      %p104 = scmp.eq.s32.totalorder %s21, 0
      %p105 = por %p103, %p104
      %p106 = scmp.ne.s32.totalorder %s94, %s95
      %p107 = scmp.eq.s32.totalorder %s22, 1
      %p108 = por %p106, %p107
      %p110 = scmp.ne.s32.totalorder %s95, %s109
      %p111 = scmp.eq.s32.totalorder %s22, 0
      %p112 = por %p110, %p111
      %s114 = sadd.s32 %s113, 1
      %p117 = scmp.eq.s32.totalorder %s16, 1
      %p118 = scmp.ne.s32.totalorder %s113, %s115
      %p119 = scmp.eq.s32.totalorder %s16, 0
      %p120 = por %p118, %p119
      %p121 = scmp.ne.s32.totalorder %s113, %s115
      %p122 = scmp.eq.s32.totalorder %s21, 1
      %p123 = por %p121, %p122
      %p124 = scmp.ne.s32.totalorder %s115, %s116
      %p125 = scmp.eq.s32.totalorder %s21, 0
      %p126 = por %p124, %p125
      %p127 = scmp.ne.s32.totalorder %s115, %s116
      %p128 = scmp.eq.s32.totalorder %s22, 1
      %p129 = por %p127, %p128
      %p131 = scmp.ne.s32.totalorder %s116, %s130
      %p132 = scmp.eq.s32.totalorder %s22, 0
      %p133 = por %p131, %p132
      %s135 = sadd.s32 %s134, 1
      %p138 = scmp.eq.s32.totalorder %s16, 1
      %p139 = scmp.ne.s32.totalorder %s134, %s136
      %p140 = scmp.eq.s32.totalorder %s16, 0
      %p141 = por %p139, %p140
      %p142 = scmp.ne.s32.totalorder %s134, %s136
      %p143 = scmp.eq.s32.totalorder %s21, 1
      %p144 = por %p142, %p143
      %p145 = scmp.ne.s32.totalorder %s136, %s137
      %p146 = scmp.eq.s32.totalorder %s21, 0
      %p147 = por %p145, %p146
      %p148 = scmp.ne.s32.totalorder %s136, %s137
      %p149 = scmp.eq.s32.totalorder %s22, 1
      %p150 = por %p148, %p149
      %p152 = scmp.ne.s32.totalorder %s137, %s151
      %p153 = scmp.eq.s32.totalorder %s22, 0
      %p154 = por %p152, %p153
      %s156 = sadd.s32 %s155, 1
      %p159 = scmp.eq.s32.totalorder %s16, 1
      %p160 = scmp.ne.s32.totalorder %s155, %s157
      %p161 = scmp.eq.s32.totalorder %s16, 0
      %p162 = por %p160, %p161
      %p163 = scmp.ne.s32.totalorder %s155, %s157
      %p164 = scmp.eq.s32.totalorder %s21, 1
      %p165 = por %p163, %p164
      %p166 = scmp.ne.s32.totalorder %s157, %s158
      %p167 = scmp.eq.s32.totalorder %s21, 0
      %p168 = por %p166, %p167
      %p169 = scmp.ne.s32.totalorder %s157, %s158
      %p170 = scmp.eq.s32.totalorder %s22, 1
      %p171 = por %p169, %p170
      %p173 = scmp.ne.s32.totalorder %s158, %s172
      %p174 = scmp.eq.s32.totalorder %s22, 0
      %p175 = por %p173, %p174
      %s176 = ssub.s32 %s16, %s23
      %p177 = scmp.eq.s32.totalorder %s176, 0
      %s179 = sadd.s32 %s178, 1
      %s180 = scalar_select %p177, %s178, %s179
      %p183 = pneg %p177
      %p184 = scmp.eq.s32.totalorder %s16, 1
      %p185 = por %p183, %p184
      %p186 = scmp.ne.s32.totalorder %s178, %s181
      %p187 = scmp.eq.s32.totalorder %s16, 0
      %p188 = por %p186, %p187
      %p189 = scmp.ne.s32.totalorder %s178, %s181
      %p190 = scmp.eq.s32.totalorder %s21, 1
      %p191 = por %p189, %p190
      %p192 = scmp.ne.s32.totalorder %s181, %s182
      %p193 = scmp.eq.s32.totalorder %s21, 0
      %p194 = por %p192, %p193
      %p195 = scmp.ne.s32.totalorder %s181, %s182
      %p196 = scmp.eq.s32.totalorder %s22, 1
      %p197 = por %p195, %p196
      %p199 = scmp.ne.s32.totalorder %s182, %s198
      %p200 = scmp.eq.s32.totalorder %s22, 0
      %p201 = por %p199, %p200
      %p202 = scmp.le.s32.totalorder 1, %s16
      %p203 = scmp.lt.s32.totalorder %s16, 3
      %p204 = pnand %p202, %p203
      %p205 = pneg %p204
      // Predicated region
      $region9: #{tpu_custom_call.1} parent=5 // pred_check
        _
      $region10: #{tpu_custom_call.1} parent=5 // pred_check_branch
        %207 = sbr.rel (%p204) target = $region12
      $region11: #{tpu_custom_call.1} parent=5 // pred_region
        %s208 = ssub.s32 %s16, 1
        // Predicated region
        $region13: #{tpu_custom_call.1} parent=11 // pred_check
          %p209 = pneg %p63
        $region14: #{tpu_custom_call.1} parent=11 // pred_check_branch
          %211 = sbr.rel (%p209) target = $region16
        $region15: #{tpu_custom_call.1} parent=11 // pred_region
          _
        $region16: #{tpu_custom_call.1} parent=11 // pred_fallthru
          _
        // Predicated region
        $region17: #{tpu_custom_call.1} parent=11 // pred_check
          %p212 = pneg %p84
        $region18: #{tpu_custom_call.1} parent=11 // pred_check_branch
          %214 = sbr.rel (%p212) target = $region20
        $region19: #{tpu_custom_call.1} parent=11 // pred_region
          _
        $region20: #{tpu_custom_call.1} parent=11 // pred_fallthru
          _
        // Predicated region
        $region21: #{tpu_custom_call.1} parent=11 // pred_check
          %p215 = pneg %p105
        $region22: #{tpu_custom_call.1} parent=11 // pred_check_branch
          %217 = sbr.rel (%p215) target = $region24
        $region23: #{tpu_custom_call.1} parent=11 // pred_region
          _
        $region24: #{tpu_custom_call.1} parent=11 // pred_fallthru
          _
        // Predicated region
        $region25: #{tpu_custom_call.1} parent=11 // pred_check
          %p218 = pneg %p126
        $region26: #{tpu_custom_call.1} parent=11 // pred_check_branch
          %220 = sbr.rel (%p218) target = $region28
        $region27: #{tpu_custom_call.1} parent=11 // pred_region
          _
        $region28: #{tpu_custom_call.1} parent=11 // pred_fallthru
          _
        // Predicated region
        $region29: #{tpu_custom_call.1} parent=11 // pred_check
          %p221 = pneg %p147
        $region30: #{tpu_custom_call.1} parent=11 // pred_check_branch
          %223 = sbr.rel (%p221) target = $region32
        $region31: #{tpu_custom_call.1} parent=11 // pred_region
          _
        $region32: #{tpu_custom_call.1} parent=11 // pred_fallthru
          _
        // Predicated region
        $region33: #{tpu_custom_call.1} parent=11 // pred_check
          %p224 = pneg %p168
        $region34: #{tpu_custom_call.1} parent=11 // pred_check_branch
          %226 = sbr.rel (%p224) target = $region36
        $region35: #{tpu_custom_call.1} parent=11 // pred_region
          _
        $region36: #{tpu_custom_call.1} parent=11 // pred_fallthru
          _
      $region12: #{tpu_custom_call.1} parent=5 // pred_fallthru
        _
      %p227 = scmp.lt.s32.totalorder %s16, 2
      // Predicated region
      $region37: #{tpu_custom_call.1} parent=5 // pred_check
        %p228 = pneg %p227
      $region38: #{tpu_custom_call.1} parent=5 // pred_check_branch
        %230 = sbr.rel (%p228) target = $region40
      $region39: #{tpu_custom_call.1} parent=5 // pred_region
        // Predicated region
        $region41: #{tpu_custom_call.1} parent=39 // pred_check
          %p231 = pneg %p36
        $region42: #{tpu_custom_call.1} parent=39 // pred_check_branch
          %233 = sbr.rel (%p231) target = $region44
        $region43: #{tpu_custom_call.1} parent=39 // pred_region
          %p234 = scmp.lt.s32.totalorder %s16, 1
          %s235 = scalar_select %p234, %s16, 1
          %s236 = smul.addr %s235, 8
          %s237 = scalar_lea.vmem %s0, %s236
        $region44: #{tpu_custom_call.1} parent=39 // pred_fallthru
          _
      $region40: #{tpu_custom_call.1} parent=5 // pred_fallthru
        _
      %p238 = scmp.le.s32.totalorder 1, %s16
      %p239 = scmp.lt.s32.totalorder %s16, 3
      %p240 = pnand %p238, %p239
      %p241 = pneg %p240
      // Predicated region
      $region45: #{tpu_custom_call.1} parent=5 // pred_check
        _
      $region46: #{tpu_custom_call.1} parent=5 // pred_check_branch
        %243 = sbr.rel (%p240) target = $region48
      $region47: #{tpu_custom_call.1} parent=5 // pred_region
        %s244 = ssub.s32 %s16, 1
        %p245 = scmp.lt.s32.totalorder %s21, 1
        %s246 = scalar_select %p245, %s21, 1
        %s247 = smul.addr %s246, 8
        %s248 = scalar_lea.vmem %s0, %s247
        %p249 = pneg %p42
        %p250 = pneg %p39
        %p251 = pneg %p63
        %p252 = pneg %p60
        %p253 = pneg %p84
        %p254 = pneg %p81
        %p255 = pneg %p105
        %p256 = pneg %p102
        %p257 = pneg %p126
        %p258 = pneg %p123
        %p259 = pneg %p147
        %p260 = pneg %p144
        %p261 = pneg %p168
        %p262 = pneg %p165
        %p263 = pneg %p194
        %p264 = pneg %p191
        %s265 = sand.u32 %s181, 1
        %s266 = scalar_lea.sflag [#allocation3], %s265
        %s267 = sand.u32 %s181, 1
        %s268 = scalar_lea.vmem [#allocation2], %s267
        %p269 = scmp.lt.s32.totalorder %s21, 1
        %s270 = scalar_select %p269, %s21, 1
        %s271 = smul.addr %s270, 8
        %s272 = scalar_lea.vmem %s0, %s271
        %v274 = vld [vmem:[%s272] sm:$0xff]
        %v275 = vpack.c.bf16 %v274, %v274
        %v276 = vld [vmem:[%s1] sm:$0xff]
        %v277 = vld [vmem:[%s1 + $0x8] sm:$0xff]
        %v278 = vld [vmem:[%s1 + $0x10] sm:$0xff]
        %v279 = vld [vmem:[%s1 + $0x18] sm:$0xff]
        %v280 = vpack.c.bf16 %v277, %v276
        %v281 = vpack.c.bf16 %v279, %v278
        %v282 = vld [vmem:[%s2] sm:$0x1]
        %v284 = vperm.slane %v282, 0
        %vm286 = vcmask 261120
        %v288 = vsel %vm286, %v275, 0
        %290 = vmatpush.bf16.msra.mxu0 0
        %291 = vmatpush.bf16.msra.mxu0 0
        %292 = vmatpush.bf16.msra.mxu0 0
        %293 = vmatpush.bf16.msra.mxu0 0
        %294 = vmatpush.bf16.msra.mxu0 0
        %295 = vmatpush.bf16.msra.mxu0 0
        %296 = vmatpush.bf16.msra.mxu0 %v281
        %297 = vmatpush.bf16.msra.mxu0 %v280
        %298 = vmatmul.bf16.gmra.mxu0 %v288
        %v299 = vpop.f32.mrf.mxu0
        %v300 = vadd.f32 %v284, %v299
        %v301 = vpop.f32.mrf.mxu0
        %302 = vdwg.mxu0
        %v303 = vmul.f32 %v300, 0.5
        %v304 = vmul.f32 %v300, 0.70710677
        %v305 = vmul.f32 %v304, %v304
        %v306 = vmin.f32 16.0, %v305
        %v307 = vmul.f32 %v306, 2.1237322e-06
        %v308 = vadd.f32 %v307, 0.00028619796
        %v309 = vmul.f32 %v306, %v308
        %v310 = vadd.f32 %v309, 0.0036580483
        %v311 = vmul.f32 %v306, %v310
        %v312 = vadd.f32 %v311, 0.05243302
        %v313 = vmul.f32 %v306, %v312
        %v314 = vadd.f32 %v313, 0.18741608
        %v315 = vmul.f32 %v306, %v314
        %v316 = vadd.f32 %v315, 1.1283791
        %v317 = vmul.f32 %v304, %v316
        %v318 = vmul.f32 %v306, 3.8918573e-05
        %v319 = vadd.f32 %v318, 0.001143296
        %v320 = vmul.f32 %v306, %v319
        %v321 = vadd.f32 %v320, 0.014752088
        %v322 = vmul.f32 %v306, %v321
        %v323 = vadd.f32 %v322, 0.112945676
        %v324 = vmul.f32 %v306, %v323
        %v325 = vadd.f32 %v324, 0.4994258
        %v326 = vmul.f32 %v306, %v325
        %v327 = vadd.f32 %v326, 1.0
        %v328 = vrcp.pop %v327
        %v329 = vmul.f32 %v327, %v328
        %v330 = vsub.f32 1.0, %v329
        %v331 = vmul.f32 %v328, %v330
        %v332 = vadd.f32 %v328, %v331
        %vm333 = vweird.f32 %v327
        %vm334 = vweird.f32 %v328
        %vm335 = vmor %vm333, %vm334
        %v336 = vsel %vm335, %v328, %v332
        %v337 = vand.u32 2147483647, %v327
        %vm338 = vcmp.eq.f32.partialorder %v337, 8.507059e+37
        %v339 = vand.u32 %v327, 2147483648
        %v340 = vor.u32 1.1754944e-38, %v339
        %v341 = vsel %vm338, %v340, %v336
        %v342 = vmul.f32 %v317, %v341
        %v343 = vmin.f32 %v342, 1.0
        %v344 = vmax.f32 %v343, -1.0
        %v345 = vadd.f32 %v344, 1.0
        %v346 = vmul.f32 %v303, %v345
        %v347 = vpack.c.bf16 %v346, %v346
        %v348 = vld [vmem:[%s3] sm:$0xff]
        %v349 = vld [vmem:[%s3 + $0x8] sm:$0xff]
        %v350 = vld [vmem:[%s3 + $0x10] sm:$0xff]
        %v351 = vld [vmem:[%s3 + $0x18] sm:$0xff]
        %v352 = vld [vmem:[%s3 + $0x20] sm:$0xff]
        %v353 = vld [vmem:[%s3 + $0x28] sm:$0xff]
        %v354 = vld [vmem:[%s3 + $0x30] sm:$0xff]
        %v355 = vld [vmem:[%s3 + $0x38] sm:$0xff]
        %v356 = vpack.c.bf16 %v349, %v348
        %v357 = vpack.c.bf16 %v351, %v350
        %v358 = vpack.c.bf16 %v353, %v352
        %v359 = vpack.c.bf16 %v355, %v354
        %v360 = vld [vmem:[%s4] sm:$0x1]
        %v362 = vperm.slane %v360, 0
        %vm364 = vcmask 523264
        %v366 = vsel %vm364, %v347, 0
        %368 = vmatpush.bf16.msra.mxu0 0
        %369 = vmatpush.bf16.msra.mxu0 0
        %370 = vmatpush.bf16.msra.mxu0 0
        %371 = vmatpush.bf16.msra.mxu0 0
        %372 = vmatpush.bf16.msra.mxu0 %v359
        %373 = vmatpush.bf16.msra.mxu0 %v358
        %374 = vmatpush.bf16.msra.mxu0 %v357
        %375 = vmatpush.bf16.msra.mxu0 %v356
        %376 = vmatmul.bf16.gmra.mxu0 %v366
        %v377 = vpop.f32.mrf.mxu0
        %v378 = vadd.f32 %v362, %v377
        %v379 = vpop.f32.mrf.mxu0
        %380 = vdwg.mxu0
        %v381 = vsel %vm286, %v378, 0.0
        %382 = vadd.xlane.f32.xlu0 %v381
        %v383 = vpop.xlane.xlu0 %382
        %v384 = vmul.f32 %v383, 0.03125
        %v385 = vsub.f32 %v378, %v384
        %v386 = vmul.f32 %v385, %v385
        %v387 = vsel %vm286, %v386, 0.0
        %388 = vadd.xlane.f32.xlu0 %v387
        %v389 = vpop.xlane.xlu0 %388
        %v390 = vmul.f32 %v389, 0.03125
        %v391 = vadd.f32 %v390, 1e-05
        %v392 = vrsqrt.pop %v391
        %v393 = vmul.f32 %v392, %v391
        %v394 = vmul.f32 %v393, %v392
        %v395 = vmul.f32 0.5, %v394
        %v396 = vsub.f32 1.5, %v395
        %v397 = vmul.f32 %v392, %v396
        %vm398 = vweird.f32 %v391
        %vm399 = vweird.f32 %v392
        %vm400 = vmor %vm398, %vm399
        %v401 = vsel %vm400, %v392, %v397
        %v402 = vmul.f32 %v385, %v401
        %v403 = vld [vmem:[%s5] sm:$0x1]
        %v405 = vperm.slane %v403, 0
        %v407 = vmul.f32 %v402, %v405
        %v408 = vld [vmem:[%s6] sm:$0x1]
        %v410 = vperm.slane %v408, 0
        %v412 = vadd.f32 %v407, %v410
        %v413 = vadd.f32 %v412, %v378
        %v414 = vsel %vm286, %v413, 0.0
        %v415 = vrot.slane %v414, 4
        %v416 = vadd.f32 %v414, %v415
        %v417 = vrot.slane %v416, 2
        %v418 = vadd.f32 %v416, %v417
        %v419 = vrot.slane %v418, 1
        %v420 = vadd.f32 %v418, %v419
        %vm421 = vcmask 253952
        %422 = vst.msk [vmem:[%s268] sm:$0x1] %vm421, %v420
        %s423 = sand.u32 %s181, 1
        %s424 = scalar_lea.sflag [#allocation3], %s423
        %s425 = sand.u32 %s181, 1
        %s426 = scalar_lea.vmem [#allocation2], %s425
        // Predicated region
        $region49: #{tpu_custom_call.1} parent=47 // pred_check
          %p427 = pneg %p191
        $region50: #{tpu_custom_call.1} parent=47 // pred_check_branch
          %429 = sbr.rel (%p427) target = $region52
        $region51: #{tpu_custom_call.1} parent=47 // pred_region
          %431 = vsyncadd %s424, 0
          %s432 = scalar_lea.hbm %s7, %s21
          %s434 = sshll.u32 %s426, 4
          %s435 = int_to_ptr.vmem [resolvable:$true] %s434
          %s436 = sshll.u32 %s432, 4
          %s437 = int_to_ptr.hbm [resolvable:$true] %s436
          %439 = dma.vmem_to_hbm [thread:$0]  %s435, 16, %s437, %s424
        $region52: #{tpu_custom_call.1} parent=47 // pred_fallthru
          _
      $region48: #{tpu_custom_call.1} parent=5 // pred_fallthru
        _
      %p440 = scmp.le.s32.totalorder 2, %s16
      // Predicated region
      $region53: #{tpu_custom_call.1} parent=5 // pred_check
        %p441 = pneg %p440
      $region54: #{tpu_custom_call.1} parent=5 // pred_check_branch
        %443 = sbr.rel (%p441) target = $region56
      $region55: #{tpu_custom_call.1} parent=5 // pred_region
        %s444 = ssub.s32 %s16, 2
        // Predicated region
        $region57: #{tpu_custom_call.1} parent=55 // pred_check
          %p445 = pneg %p197
        $region58: #{tpu_custom_call.1} parent=55 // pred_check_branch
          %447 = sbr.rel (%p445) target = $region60
        $region59: #{tpu_custom_call.1} parent=55 // pred_region
          %s448 = sand.u32 %s182, 1
          %s449 = scalar_lea.sflag [#allocation3], %s448
          %s450 = sand.u32 %s182, 1
          %s451 = scalar_lea.vmem [#allocation2], %s450
          %453 = dma.done %s449, 16
        $region60: #{tpu_custom_call.1} parent=55 // pred_fallthru
          _
      $region56: #{tpu_custom_call.1} parent=5 // pred_fallthru
        _
    $region6: #{tpu_custom_call.1} parent=1 // loop_footer
      %s20 = sadd.s32 1, %s16
    $region7: #{tpu_custom_call.1} parent=1 // loop_footer_branch
      %15 = sbr.rel target = $region3
    $region8: #{tpu_custom_call.1} parent=1 // loop_exit
      _
    %454 = vsyncpa [#allocation3], 1
    %s455 = scalar_lea.sflag [#allocation3], 1
    %456 = vsyncpa %s455, 1

</llo_original>
